<compile_context>
chip_gen: v7x
topology: tpu7x:2x2x1
jax: 0.10.0
libtpu: 0.0.40
codegen_flags: <defaults>
</compile_context>

<pallas_src>
import functools

import jax
import jax.numpy as jnp
from jax.experimental import pallas as pl
from jax.experimental.pallas import tpu as pltpu

IGNORE_INDEX = -100


def _chip_kind():
    try:
        return jax.devices()[0].device_kind.lower()
    except Exception:
        return ""


def _vmem_capacity_bytes():
    try:
        info = pltpu.get_tpu_info()
        cap = getattr(info, "vmem_capacity_bytes", None)
        if cap:
            return int(cap)
    except Exception:
        pass
    kind = _chip_kind()
    if "v7" in kind or "7x" in kind:
        return 64 << 20          # v7x: 64 MiB per TensorCore
    return 128 << 20             # v5e / v6e: 128 MiB


def _supports_bf16_vpu():
    # v6e / v7x have native bf16 VPU; v5e (and older) do not.
    kind = _chip_kind()
    return ("v6" in kind) or ("v7" in kind) or ("7x" in kind)


def _choose_vocab_tile(V, tile_vocab=None):
    """Vocab chunk size: full vocab if small, else a lane-dense 4096.

    The vocab tail (V % TV != 0) is masked in-kernel on the last chunk only,
    so TV never degenerates to 128/256 for awkward vocab sizes (32000, 151936).
    """
    if tile_vocab is not None:
        tv = int(tile_vocab)
        assert tv == V or tv % 128 == 0, "tile_vocab must be V or a multiple of 128"
        return tv
    if V <= 4096:
        return V                 # single chunk; full-dim block is always legal
    return 4096


def _choose_row_tile(N, TV, itemsize, vmem_cap):
    """Row tile sized so the double-buffered logits block uses ~1/3 of VMEM."""
    buf_budget = vmem_cap // 3
    tr = buf_budget // (2 * TV * itemsize)
    # v7x (64 MiB VMEM): cap at 512 rows (~1% BW cost, leaves pipeline headroom).
    cap = 512 if vmem_cap <= (64 << 20) else 1024
    tr = max(8, min(cap, (tr // 8) * 8))
    n_ceil = ((N + 7) // 8) * 8
    return max(8, min(tr, n_ceil))


def _seq_ce_kernel(y_ref, t_ref, nll_ref, m_ref, l_ref, tg_ref, *,
                   tv, last_chunk_valid, mask_tail, low_precision,
                   ignore_index):
    """Online-LSE cross-entropy over vocab chunks; per-row NLL out."""
    j = pl.program_id(1)                      # vocab axis (last, "arbitrary")
    nv = pl.num_programs(1)

    @pl.when(j == 0)
    def _():
        m_ref[...] = jnp.full_like(m_ref, -jnp.inf)
        l_ref[...] = jnp.zeros_like(l_ref)
        tg_ref[...] = jnp.zeros_like(tg_ref)

    tile = y_ref[...]                         # (TR, TV) in input dtype
    if not low_precision:
        tile = tile.astype(jnp.float32)
    tgt = t_ref[...]                          # (TR, 1) int32

    # Chunk-local lane index; the global offset is folded into tgt instead of
    # a full-tile add (saves one VALU op per element in the hot loop).
    lane = jax.lax.broadcasted_iota(jnp.int32, tile.shape, 1)
    tgt_local = tgt - j * tv                  # (TR, 1)

    def update(t):
        # Streaming logsumexp (per-row; reductions go to the XLU).
        chunk_max = jnp.max(t, axis=-1, keepdims=True).astype(jnp.float32)
        m_prev = m_ref[...]
        m_new = jnp.maximum(m_prev, chunk_max)
        l_ref[...] = jnp.exp(m_prev - m_new) * l_ref[...] + jnp.sum(
            jnp.exp(t.astype(jnp.float32) - m_new), axis=-1, keepdims=True)
        m_ref[...] = m_new
        # Target-logit gather: the matching lane is hit in exactly one chunk.
        tg_ref[...] += jnp.sum(
            jnp.where(lane == tgt_local, t, jnp.asarray(0, t.dtype)),
            axis=-1, keepdims=True).astype(jnp.float32)

    if mask_tail:
        # Pad mask is only needed on the final vocab chunk; skip the cmp+select
        # on every other chunk.
        neg = jnp.asarray(-1e30, dtype=tile.dtype)

        @pl.when(j == nv - 1)
        def _():
            update(jnp.where(lane < last_chunk_valid, tile, neg))

        @pl.when(j < nv - 1)
        def _():
            update(tile)
    else:
        update(tile)

    @pl.when(j == nv - 1)
    def _():
        nll = (m_ref[...] + jnp.log(l_ref[...])) - tg_ref[...]   # (TR, 1)
        valid = tgt != ignore_index            # also masks padded / garbage rows
        nll_ref[...] = jnp.where(valid, nll, jnp.float32(0.0))


def seq_loss(y, targets, *, tile_rows=None, tile_vocab=None):
    """SeqLoss.forward(y, targets) with inner loss = CrossEntropyLoss(mean).

    y: (..., V) logits (f32 or bf16 -- feed bf16 to halve HBM traffic).
    targets: (...) int labels; entries equal to -100 are ignored.
    Returns scalar f32, or None when targets is None (matches the module).
    """
    if targets is None:
        return None

    V = y.shape[-1]
    y2 = y.reshape(-1, V)                     # y.view(-1, y.shape[-1]); no copy
    t1 = targets.reshape(-1).astype(jnp.int32)
    N = y2.shape[0]

    itemsize = jnp.dtype(y.dtype).itemsize
    vmem_cap = _vmem_capacity_bytes()
    TV = _choose_vocab_tile(V, tile_vocab)
    TR = tile_rows if tile_rows is not None else _choose_row_tile(
        N, TV, itemsize, vmem_cap)
    assert TR % 8 == 0, "tile_rows must be a multiple of 8"

    n_row_tiles = pl.cdiv(N, TR)
    n_vocab_chunks = pl.cdiv(V, TV)
    N_pad = n_row_tiles * TR
    mask_tail = (n_vocab_chunks * TV) != V
    last_chunk_valid = V - (n_vocab_chunks - 1) * TV   # static Python int

    # Only the tiny targets vector is padded; the (N, V) logits are NOT padded
    # (Pallas boundary blocks read undefined data which the kernel masks out
    # via ignore_index / the lane mask).
    if N_pad != N:
        t1 = jnp.pad(t1, (0, N_pad - N), constant_values=IGNORE_INDEX)
    t2 = t1.reshape(N_pad, 1)

    low_precision = (y.dtype == jnp.bfloat16) and _supports_bf16_vpu()

    # VMEM budget: double-buffered logits block + tiny (TR,1) blocks/scratch.
    needed = 2 * TR * TV * itemsize + 8 * TR * 4 + (1 << 20)
    vmem_limit = int(min(vmem_cap - (8 << 20),
                         max(needed + (16 << 20), 32 << 20)))

    grid = (n_row_tiles, n_vocab_chunks)

    # TODO(synk): on v7x, verify both TensorCores pick up the row axis; if the
    # profiler shows one TC idle, switch the row dim to pltpu.CORE_PARALLEL.
    nll = pl.pallas_call(
        functools.partial(
            _seq_ce_kernel,
            tv=TV, last_chunk_valid=last_chunk_valid, mask_tail=mask_tail,
            low_precision=low_precision, ignore_index=IGNORE_INDEX),
        out_shape=jax.ShapeDtypeStruct((N_pad, 1), jnp.float32),
        grid_spec=pltpu.PrefetchScalarGridSpec(
            num_scalar_prefetch=0,
            grid=grid,
            in_specs=[
                pl.BlockSpec((TR, TV), lambda i, j: (i, j)),
                pl.BlockSpec((TR, 1), lambda i, j: (i, 0)),
            ],
            out_specs=pl.BlockSpec((TR, 1), lambda i, j: (i, 0)),
            scratch_shapes=[
                pltpu.VMEM((TR, 1), jnp.float32),   # running max m
                pltpu.VMEM((TR, 1), jnp.float32),   # running sum l
                pltpu.VMEM((TR, 1), jnp.float32),   # target logit accum
            ],
        ),
        compiler_params=pltpu.CompilerParams(
            dimension_semantics=("parallel", "arbitrary"),
            vmem_limit_bytes=vmem_limit),
    )(y2, t2)

    n_valid = jnp.sum(targets != IGNORE_INDEX).astype(jnp.float32)
    return jnp.sum(nll) / n_valid


def _reference(y, targets, ignore_index=IGNORE_INDEX):
    # pure-JAX reference: mean cross-entropy over flattened rows (ignore -100)
    V = y.shape[-1]
    y2 = y.reshape(-1, V).astype(jnp.float32)
    t2 = targets.reshape(-1)
    valid = t2 != ignore_index
    lse = jax.nn.logsumexp(y2, axis=-1)
    tgt = jnp.take_along_axis(y2, jnp.where(valid, t2, 0)[:, None], axis=-1)[:, 0]
    per_row = jnp.where(valid, lse - tgt, 0.0)
    return jnp.sum(per_row) / jnp.sum(valid).astype(jnp.float32)


if __name__ == "__main__":
    # Test 1: clean shapes (batch=2, seq=8, vocab=32), f32, single vocab chunk.
    B, T, V = 2, 8, 32
    ky, kt = jax.random.split(jax.random.PRNGKey(0))
    y = jax.random.normal(ky, (B, T, V), dtype=jnp.float32)
    targets = jax.random.randint(kt, (B, T), 0, V, dtype=jnp.int32)

    loss = jax.block_until_ready(seq_loss(y, targets))
    ref = jax.block_until_ready(_reference(y, targets))
    assert jnp.allclose(loss, ref, rtol=1e-5, atol=1e-5), (loss, ref)

    # Test 2: ragged N (no logits padding; boundary row block) + ignored target.
    k2y, k2t = jax.random.split(jax.random.PRNGKey(1))
    y2 = jax.random.normal(k2y, (1, 5, V), dtype=jnp.float32)
    t2 = jax.random.randint(k2t, (1, 5), 0, V, dtype=jnp.int32)
    t2 = t2.at[0, 2].set(IGNORE_INDEX)
    loss2 = jax.block_until_ready(seq_loss(y2, t2))
    ref2 = jax.block_until_ready(_reference(y2, t2))
    assert jnp.allclose(loss2, ref2, rtol=1e-5, atol=1e-5), (loss2, ref2)

    # Test 3: bf16 input, multi-chunk vocab with a masked tail (V=160, TV=128)
    # exercises the streaming LSE, last-chunk lane mask, and bf16 fast path.
    V3 = 160
    k3y, k3t = jax.random.split(jax.random.PRNGKey(2))
    y3 = jax.random.normal(k3y, (2, 8, V3), dtype=jnp.float32).astype(jnp.bfloat16)
    t3 = jax.random.randint(k3t, (2, 8), 0, V3, dtype=jnp.int32)
    t3 = t3.at[0, 0].set(IGNORE_INDEX)
    loss3 = jax.block_until_ready(seq_loss(y3, t3, tile_vocab=128))
    ref3 = jax.block_until_ready(_reference(y3, t3))
    assert jnp.allclose(loss3, ref3, rtol=1e-4, atol=1e-4), (loss3, ref3)

    # Module contract: targets=None returns None.
    assert seq_loss(y, None) is None

    print("KERNEL_OK")
</pallas_src>

<mosaic_0001>
module attributes {stable_mosaic.version = 11 : i64} {
  func.func @_seq_ce_kernel(%arg0: i32, %arg1: i32, %arg2: memref<16x32xf32, #tpu.memory_space<vmem>>, %arg3: memref<16x1xi32, #tpu.memory_space<vmem>>, %arg4: memref<16x1xf32, #tpu.memory_space<vmem>>, %arg5: memref<16x1xf32, #tpu.memory_space<vmem>>, %arg6: memref<16x1xf32, #tpu.memory_space<vmem>>, %arg7: memref<16x1xf32, #tpu.memory_space<vmem>>) attributes {dimension_semantics = [#tpu.dimension_semantics<parallel>, #tpu.dimension_semantics<arbitrary>], iteration_bounds = array<i64: 1, 1>, scalar_prefetch = 0 : i64, scratch_operands = 3 : i64, tpu.core_type = #tpu.core_type<tc>, window_params = [{transform_indices = @transform_0, window_bounds = array<i64: 16, 32>}, {transform_indices = @transform_1, window_bounds = array<i64: 16, 1>}, {transform_indices = @transform_2, window_bounds = array<i64: 16, 1>}]} {
    %c0_i32 = arith.constant 0 : i32
    %0 = arith.cmpi eq, %arg1, %c0_i32 : i32
    %1 = arith.extui %0 : i1 to i32
    %c0_i32_0 = arith.constant 0 : i32
    %2 = arith.cmpi ne, %1, %c0_i32_0 : i32
    scf.if %2 {
      %cst_21 = arith.constant 0xFF800000 : f32
      %37 = vector.broadcast %cst_21 : f32 to vector<16x1xf32>
      %c0_22 = arith.constant 0 : index
      %c0_23 = arith.constant 0 : index
      %38 = vector.load %arg5[%c0_22, %c0_23] : memref<16x1xf32, #tpu.memory_space<vmem>>, vector<16x1xf32>
      tpu.vector_store %arg5[%c0_22, %c0_23], %37 {strides = array<i32>} : memref<16x1xf32, #tpu.memory_space<vmem>>, vector<16x1xf32>,
      %cst_24 = arith.constant 0.000000e+00 : f32
      %39 = vector.broadcast %cst_24 : f32 to vector<16x1xf32>
      %c0_25 = arith.constant 0 : index
      %c0_26 = arith.constant 0 : index
      %40 = vector.load %arg6[%c0_25, %c0_26] : memref<16x1xf32, #tpu.memory_space<vmem>>, vector<16x1xf32>
      tpu.vector_store %arg6[%c0_25, %c0_26], %39 {strides = array<i32>} : memref<16x1xf32, #tpu.memory_space<vmem>>, vector<16x1xf32>,
      %cst_27 = arith.constant 0.000000e+00 : f32
      %41 = vector.broadcast %cst_27 : f32 to vector<16x1xf32>
      %c0_28 = arith.constant 0 : index
      %c0_29 = arith.constant 0 : index
      %42 = vector.load %arg7[%c0_28, %c0_29] : memref<16x1xf32, #tpu.memory_space<vmem>>, vector<16x1xf32>
      tpu.vector_store %arg7[%c0_28, %c0_29], %41 {strides = array<i32>} : memref<16x1xf32, #tpu.memory_space<vmem>>, vector<16x1xf32>,
    } else {
    }
    %c0 = arith.constant 0 : index
    %c0_1 = arith.constant 0 : index
    %3 = vector.load %arg2[%c0, %c0_1] : memref<16x32xf32, #tpu.memory_space<vmem>>, vector<16x32xf32>
    %c0_2 = arith.constant 0 : index
    %c0_3 = arith.constant 0 : index
    %4 = vector.load %arg3[%c0_2, %c0_3] : memref<16x1xi32, #tpu.memory_space<vmem>>, vector<16x1xi32>
    %5 = tpu.iota {dimensions = array<i32: 1>} : vector<16x32xi32>
    %c32_i32 = arith.constant 32 : i32
    %6 = arith.muli %arg1, %c32_i32 : i32
    %7 = vector.broadcast %6 : i32 to vector<16x1xi32>
    %8 = arith.subi %4, %7 : vector<16x1xi32>
    %cst = arith.constant dense<0xFF800000> : vector<16xf32>
    %9 = vector.multi_reduction <maximumf>, %3, %cst [1] : vector<16x32xf32> to vector<16xf32>
    %10 = vector.shape_cast %9 : vector<16xf32> to vector<16x1xf32>
    %c0_4 = arith.constant 0 : index
    %c0_5 = arith.constant 0 : index
    %11 = vector.load %arg5[%c0_4, %c0_5] : memref<16x1xf32, #tpu.memory_space<vmem>>, vector<16x1xf32>
    %12 = arith.maximumf %11, %10 : vector<16x1xf32>
    %13 = arith.subf %11, %12 : vector<16x1xf32>
    %14 = math.exp %13 : vector<16x1xf32>
    %c0_6 = arith.constant 0 : index
    %c0_7 = arith.constant 0 : index
    %15 = vector.load %arg6[%c0_6, %c0_7] : memref<16x1xf32, #tpu.memory_space<vmem>>, vector<16x1xf32>
    %16 = arith.mulf %14, %15 : vector<16x1xf32>
    %17 = vector.broadcast %12 : vector<16x1xf32> to vector<16x32xf32>
    %18 = arith.subf %3, %17 : vector<16x32xf32>
    %19 = math.exp %18 : vector<16x32xf32>
    %cst_8 = arith.constant dense<0.000000e+00> : vector<16xf32>
    %20 = vector.multi_reduction <add>, %19, %cst_8 [1] : vector<16x32xf32> to vector<16xf32>
    %21 = vector.shape_cast %20 : vector<16xf32> to vector<16x1xf32>
    %22 = arith.addf %16, %21 : vector<16x1xf32>
    %c0_9 = arith.constant 0 : index
    %c0_10 = arith.constant 0 : index
    %23 = vector.load %arg6[%c0_9, %c0_10] : memref<16x1xf32, #tpu.memory_space<vmem>>, vector<16x1xf32>
    tpu.vector_store %arg6[%c0_9, %c0_10], %22 {strides = array<i32>} : memref<16x1xf32, #tpu.memory_space<vmem>>, vector<16x1xf32>,
    %c0_11 = arith.constant 0 : index
    %c0_12 = arith.constant 0 : index
    %24 = vector.load %arg5[%c0_11, %c0_12] : memref<16x1xf32, #tpu.memory_space<vmem>>, vector<16x1xf32>
    tpu.vector_store %arg5[%c0_11, %c0_12], %12 {strides = array<i32>} : memref<16x1xf32, #tpu.memory_space<vmem>>, vector<16x1xf32>,
    %c0_13 = arith.constant 0 : index
    %c0_14 = arith.constant 0 : index
    %25 = vector.load %arg7[%c0_13, %c0_14] : memref<16x1xf32, #tpu.memory_space<vmem>>, vector<16x1xf32>
    %26 = vector.broadcast %8 : vector<16x1xi32> to vector<16x32xi32>
    %27 = arith.cmpi eq, %5, %26 : vector<16x32xi32>
    %cst_15 = arith.constant 0.000000e+00 : f32
    %28 = vector.broadcast %cst_15 : f32 to vector<16x32xf32>
    %29 = arith.select %27, %3, %28 : vector<16x32xi1>, vector<16x32xf32>
    %cst_16 = arith.constant dense<0.000000e+00> : vector<16xf32>
    %30 = vector.multi_reduction <add>, %29, %cst_16 [1] : vector<16x32xf32> to vector<16xf32>
    %31 = vector.shape_cast %30 : vector<16xf32> to vector<16x1xf32>
    %32 = arith.addf %25, %31 : vector<16x1xf32>
    %c0_17 = arith.constant 0 : index
    %c0_18 = arith.constant 0 : index
    %33 = vector.load %arg7[%c0_17, %c0_18] : memref<16x1xf32, #tpu.memory_space<vmem>>, vector<16x1xf32>
    tpu.vector_store %arg7[%c0_17, %c0_18], %32 {strides = array<i32>} : memref<16x1xf32, #tpu.memory_space<vmem>>, vector<16x1xf32>,
    %c0_i32_19 = arith.constant 0 : i32
    %34 = arith.cmpi eq, %arg1, %c0_i32_19 : i32
    %35 = arith.extui %34 : i1 to i32
    %c0_i32_20 = arith.constant 0 : i32
    %36 = arith.cmpi ne, %35, %c0_i32_20 : i32
    scf.if %36 {
      %c0_21 = arith.constant 0 : index
      %c0_22 = arith.constant 0 : index
      %37 = vector.load %arg5[%c0_21, %c0_22] : memref<16x1xf32, #tpu.memory_space<vmem>>, vector<16x1xf32>
      %c0_23 = arith.constant 0 : index
      %c0_24 = arith.constant 0 : index
      %38 = vector.load %arg6[%c0_23, %c0_24] : memref<16x1xf32, #tpu.memory_space<vmem>>, vector<16x1xf32>
      %39 = math.log %38 : vector<16x1xf32>
      %40 = arith.addf %37, %39 : vector<16x1xf32>
      %c0_25 = arith.constant 0 : index
      %c0_26 = arith.constant 0 : index
      %41 = vector.load %arg7[%c0_25, %c0_26] : memref<16x1xf32, #tpu.memory_space<vmem>>, vector<16x1xf32>
      %42 = arith.subf %40, %41 : vector<16x1xf32>
      %c-100_i32 = arith.constant -100 : i32
      %43 = vector.broadcast %c-100_i32 : i32 to vector<16x1xi32>
      %44 = arith.cmpi ne, %4, %43 : vector<16x1xi32>
      %cst_27 = arith.constant 0.000000e+00 : f32
      %45 = vector.broadcast %cst_27 : f32 to vector<16x1xf32>
      %46 = arith.select %44, %42, %45 : vector<16x1xi1>, vector<16x1xf32>
      %c0_28 = arith.constant 0 : index
      %c0_29 = arith.constant 0 : index
      %47 = vector.load %arg4[%c0_28, %c0_29] : memref<16x1xf32, #tpu.memory_space<vmem>>, vector<16x1xf32>
      tpu.vector_store %arg4[%c0_28, %c0_29], %46 {strides = array<i32>} : memref<16x1xf32, #tpu.memory_space<vmem>>, vector<16x1xf32>,
    } else {
    }
    return
  }
  func.func @transform_0(%arg0: i32, %arg1: i32) -> (i32, i32) {
    %c0_i32 = arith.constant 0 : i32
    return %arg0, %arg1 : i32, i32
  }
  func.func @transform_1(%arg0: i32, %arg1: i32) -> (i32, i32) {
    %c0_i32 = arith.constant 0 : i32
    %c0_i32_0 = arith.constant 0 : i32
    return %arg0, %c0_i32 : i32, i32
  }
  func.func @transform_2(%arg0: i32, %arg1: i32) -> (i32, i32) {
    %c0_i32 = arith.constant 0 : i32
    %c0_i32_0 = arith.constant 0 : i32
    return %arg0, %c0_i32 : i32, i32
  }
}

</mosaic_0001>

<llo_original>
// kernel: tpu_custom_call.1
$region0: #{tpu_custom_call.1}
  #allocation0 [shape = 'u32[]', space=smem, size = 0x4, offset = 0x4, fixed_abs, tag = 'smem constant byte address 0x4 - core index']
  #allocation1 [shape = 'u32[144,128]{1,0:T(1,128)}', space=vmem, size = 0x12000, scoped, tag = 'internal scratch']
  #allocation2 [shape = 'f32[16,1]{1,0:T(8,128)}', space=vmem, size = 0x2000, scoped, tag = 'scratch operand']
  #allocation3 [shape = 'f32[16,1]{1,0:T(8,128)}', space=vmem, size = 0x2000, scoped, tag = 'scratch operand']
  #allocation4 [shape = 'f32[16,1]{1,0:T(8,128)}', space=vmem, size = 0x2000, scoped, tag = 'scratch operand']
  %s0 = inlined_call_operand.vmem [shape: f32[16,32], index: 0, kind: input, shape index: {}]
  %s1 = inlined_call_operand.vmem [shape: s32[16,1], index: 1, kind: input, shape index: {}]
  %s2 = inlined_call_operand.vmem [shape: f32[16,1], index: 2, kind: output, shape index: {}]
  %s3 = sld [smem:[#allocation0]]
  $region26: #{tpu_custom_call.1} parent=0
    _
  %s5 = ssub.s32 1, %s3
  %s6 = scalar_select 0, %s5, %s3
  // Predicated region
  $region2: #{tpu_custom_call.1} parent=0 // pred_check
    _
  $region3: #{tpu_custom_call.1} parent=0 // pred_check_branch
    %8 = sbr.rel (0) target = $region5
  $region4: #{tpu_custom_call.1} parent=0 // pred_region
    _
  $region5: #{tpu_custom_call.1} parent=0 // pred_fallthru
    _
  // Predicated region
  $region6: #{tpu_custom_call.1} parent=0 // pred_check
    _
  $region7: #{tpu_custom_call.1} parent=0 // pred_check_branch
    %10 = sbr.rel (0) target = $region9
  $region8: #{tpu_custom_call.1} parent=0 // pred_region
    _
  $region9: #{tpu_custom_call.1} parent=0 // pred_fallthru
    _
  %p11 = scmp.eq.s32.totalorder 0, 0
  // Predicated region
  $region10: #{tpu_custom_call.1} parent=0 // pred_check
    %p12 = pneg %p11
  $region11: #{tpu_custom_call.1} parent=0 // pred_check_branch
    %14 = sbr.rel (%p12) target = $region13
  $region12: #{tpu_custom_call.1} parent=0 // pred_region
    %vm15 = vcmask 7168
    %16 = vst.msk [vmem:[#allocation2] sm:$0xff] %vm15, -inf
    %17 = vst.msk [vmem:[#allocation2 + $0x8] sm:$0xff] %vm15, -inf
    %18 = vst.msk [vmem:[#allocation3] sm:$0xff] %vm15, 0.0
    %19 = vst.msk [vmem:[#allocation3 + $0x8] sm:$0xff] %vm15, 0.0
    %20 = vst.msk [vmem:[#allocation4] sm:$0xff] %vm15, 0.0
    %21 = vst.msk [vmem:[#allocation4 + $0x8] sm:$0xff] %vm15, 0.0
  $region13: #{tpu_custom_call.1} parent=0 // pred_fallthru
    _
  %v22 = vld [vmem:[%s0] sm:$0xff]
  %v23 = vld [vmem:[%s0 + $0x8] sm:$0xff]
  %v24 = vld [vmem:[%s1] sm:$0xff]
  %v25 = vld [vmem:[%s1 + $0x8] sm:$0xff]
  %v26 = vlaneseq
  %v27 = vand.u32 %v26, 127
  %s28 = smul.u32 0, 32
  %v29 = vstv %s28
  %v30 = vsub.s32 %v24, %v29
  %v31 = vsub.s32 %v25, %v29
  %vm32 = vcmask 261120
  %v33 = vsel %vm32, %v22, -inf
  %34 = vmax.xlane.f32.xlu0 %v33
  %v35 = vpop.xlane.xlu0 %34
  %v36 = vsel %vm32, %v23, -inf
  %37 = vmax.xlane.f32.xlu0 %v36
  %v38 = vpop.xlane.xlu0 %37
  %v39 = vld [vmem:[#allocation2] sm:$0xff]
  %v40 = vld [vmem:[#allocation2 + $0x8] sm:$0xff]
  %v41 = vmax.f32 %v39, %v35
  %v42 = vmax.f32 %v40, %v38
  %v43 = vsub.f32 %v39, %v41
  %v44 = vsub.f32 %v40, %v42
  %v45 = vmul.f32 %v43, 1.442695
  %v46 = vpow.pop %v45
  %v47 = vmul.f32 %v44, 1.442695
  %v48 = vpow.pop %v47
  %v49 = vld [vmem:[#allocation3] sm:$0xff]
  %v50 = vld [vmem:[#allocation3 + $0x8] sm:$0xff]
  %v51 = vmul.f32 %v46, %v49
  %v52 = vmul.f32 %v48, %v50
  %54 = vset.pattern.permute.xlu0 0
  %55 = vperm.xlu0 %54, %v41
  %v56 = vpop.permute.xlu0 %55
  %59 = vset.pattern.permute.xlu0 0
  %60 = vperm.xlu0 %59, %v42
  %v61 = vpop.permute.xlu0 %60
  %v63 = vsub.f32 %v22, %v56
  %v64 = vsub.f32 %v23, %v61
  %v65 = vmul.f32 %v63, 1.442695
  %v66 = vpow.pop %v65
  %v67 = vmul.f32 %v64, 1.442695
  %v68 = vpow.pop %v67
  %v69 = vsel %vm32, %v66, 0.0
  %70 = vadd.xlane.f32.xlu0 %v69
  %v71 = vpop.xlane.xlu0 %70
  %v72 = vsel %vm32, %v68, 0.0
  %73 = vadd.xlane.f32.xlu0 %v72
  %v74 = vpop.xlane.xlu0 %73
  %v75 = vadd.f32 %v51, %v71
  %v76 = vadd.f32 %v52, %v74
  %vm77 = vcmask 7168
  %78 = vst.msk [vmem:[#allocation3] sm:$0xff] %vm77, %v75
  %79 = vst.msk [vmem:[#allocation3 + $0x8] sm:$0xff] %vm77, %v76
  %80 = vst.msk [vmem:[#allocation2] sm:$0xff] %vm77, %v41
  %81 = vst.msk [vmem:[#allocation2 + $0x8] sm:$0xff] %vm77, %v42
  %v82 = vld [vmem:[#allocation4] sm:$0xff]
  %v83 = vld [vmem:[#allocation4 + $0x8] sm:$0xff]
  %84 = vset.pattern.permute.xlu0 0
  %85 = vperm.xlu0 %84, %v30
  %v86 = vpop.permute.xlu0 %85
  %87 = vset.pattern.permute.xlu0 0
  %88 = vperm.xlu0 %87, %v31
  %v89 = vpop.permute.xlu0 %88
  %vm90 = vcmp.eq.s32.totalorder %v27, %v86
  %vm91 = vcmp.eq.s32.totalorder %v27, %v89
  %v92 = vsel %vm90, %v22, 0.0
  %v93 = vsel %vm91, %v23, 0.0
  %v94 = vsel %vm32, %v92, 0.0
  %95 = vadd.xlane.f32.xlu0 %v94
  %v96 = vpop.xlane.xlu0 %95
  %v97 = vsel %vm32, %v93, 0.0
  %98 = vadd.xlane.f32.xlu0 %v97
  %v99 = vpop.xlane.xlu0 %98
  %v100 = vadd.f32 %v82, %v96
  %v101 = vadd.f32 %v83, %v99
  %102 = vst.msk [vmem:[#allocation4] sm:$0xff] %vm77, %v100
  %103 = vst.msk [vmem:[#allocation4 + $0x8] sm:$0xff] %vm77, %v101
  // Predicated region
  $region14: #{tpu_custom_call.1} parent=0 // pred_check
    %p104 = pneg %p11
  $region15: #{tpu_custom_call.1} parent=0 // pred_check_branch
    %106 = sbr.rel (%p104) target = $region17
  $region16: #{tpu_custom_call.1} parent=0 // pred_region
    %v107 = vld [vmem:[#allocation2] sm:$0xff]
    %v108 = vld [vmem:[#allocation2 + $0x8] sm:$0xff]
    %v109 = vld [vmem:[#allocation3] sm:$0xff]
    %v110 = vld [vmem:[#allocation3 + $0x8] sm:$0xff]
    %v111 = vlog2.pop %v109
    %v112 = vmul.f32 %v111, 0.6931472
    %v113 = vlog2.pop %v110
    %v114 = vmul.f32 %v113, 0.6931472
    %v115 = vadd.f32 %v107, %v112
    %v116 = vadd.f32 %v108, %v114
    %v117 = vld [vmem:[#allocation4] sm:$0xff]
    %v118 = vld [vmem:[#allocation4 + $0x8] sm:$0xff]
    %v119 = vsub.f32 %v115, %v117
    %v120 = vsub.f32 %v116, %v118
    %vm121 = vcmp.ne.s32.totalorder %v24, 4294967196
    %vm122 = vcmp.ne.s32.totalorder %v25, 4294967196
    %v123 = vsel %vm121, %v119, 0.0
    %v124 = vsel %vm122, %v120, 0.0
    %125 = vst.msk [vmem:[%s2] sm:$0xff] %vm77, %v123
    %126 = vst.msk [vmem:[%s2 + $0x8] sm:$0xff] %vm77, %v124
  $region17: #{tpu_custom_call.1} parent=0 // pred_fallthru
    _
  // Predicated region
  $region18: #{tpu_custom_call.1} parent=0 // pred_check
    _
  $region19: #{tpu_custom_call.1} parent=0 // pred_check_branch
    %128 = sbr.rel (0) target = $region21
  $region20: #{tpu_custom_call.1} parent=0 // pred_region
    _
  $region21: #{tpu_custom_call.1} parent=0 // pred_fallthru
    _
  // Predicated region
  $region22: #{tpu_custom_call.1} parent=0 // pred_check
    _
  $region23: #{tpu_custom_call.1} parent=0 // pred_check_branch
    %130 = sbr.rel (0) target = $region25
  $region24: #{tpu_custom_call.1} parent=0 // pred_region
    _
  $region25: #{tpu_custom_call.1} parent=0 // pred_fallthru
    _

</llo_original>
